<compile_context>
chip_gen: v7x
topology: tpu7x:2x2x1
jax: 0.10.0
libtpu: 0.0.40
codegen_flags: <defaults>
</compile_context>

<pallas_src>
import functools

import jax
import jax.numpy as jnp
from jax.experimental import pallas as pl
from jax.experimental.pallas import tpu as pltpu


def _round_up(x, m):
    return ((x + m - 1) // m) * m


def mlp_kernel(x_ref, w1_ref, b1_ref, w2t_ref, b2_ref, o_ref):
    # Cast MXU operands to bf16 in-kernel (VPU convert, hidden under the MXU).
    xb = x_ref[...].astype(jnp.bfloat16)
    w1b = w1_ref[...].astype(jnp.bfloat16)

    # Layer 1 on the MXU: bf16 operands, f32 accumulation.
    h = jnp.dot(xb, w1b, preferred_element_type=jnp.float32)
    # Bias + ReLU on the VPU (f32).
    h = jnp.maximum(h + b1_ref[...], 0.0)

    num_classes = w2t_ref.shape[0]
    if num_classes == 1:
        # Matvec as VPU multiply + XLU cross-lane reduce (f32); keeps the MXU
        # free for the next tile's layer-1 matmul.
        z = jnp.sum(h * w2t_ref[...], axis=-1, keepdims=True)
    else:
        # General case: contract h's last dim with W2's last dim (W2 is [out, in]).
        z = jax.lax.dot_general(
            h.astype(jnp.bfloat16), w2t_ref[...].astype(jnp.bfloat16),
            (((1,), (1,)), ((), ())),
            preferred_element_type=jnp.float32,
        )

    z = z + b2_ref[...]
    # Sigmoid: exp goes to the EUP.
    o_ref[...] = jax.nn.sigmoid(z).astype(o_ref.dtype)


def simple_classifier_forward(x, w1, b1, w2t, b2, *, tb=None):
    """x: [B, input_size] f32.  w1: [in, hidden], b1: [1, hidden],
    w2t: [num_classes, hidden] (PyTorch [out, in] layout), b2: [1, num_classes].
    Returns [B, num_classes] f32 sigmoid probabilities."""
    B, F = x.shape
    H = w1.shape[1]
    nc = w2t.shape[0]

    # Batch tile: at least 8 (sublane multiple), capped so f32 x tiles stay
    # comfortably inside the scoped-VMEM limit (512*768*4 B * 2 buffers ~= 3 MiB).
    if tb is None:
        tb = min(512, _round_up(B, 8))
    tb = max(8, _round_up(tb, 8))
    Bp = _round_up(B, tb)

    xp = x if Bp == B else jnp.pad(x, ((0, Bp - B), (0, 0)))

    grid = (Bp // tb,)

    cost = pl.CostEstimate(
        flops=2 * Bp * F * H + 2 * Bp * H * nc,
        transcendentals=Bp * nc,
        bytes_accessed=(xp.size * 4 + w1.size * 4 + w2t.size * 4
                        + b1.size * 4 + b2.size * 4 + Bp * nc * 4),
    )

    out = pl.pallas_call(
        mlp_kernel,
        out_shape=jax.ShapeDtypeStruct((Bp, nc), jnp.float32),
        grid=grid,
        in_specs=[
            pl.BlockSpec((tb, F), lambda i: (i, 0)),   # x: tiled over batch
            pl.BlockSpec((F, H), lambda i: (0, 0)),    # W1: VMEM-resident
            pl.BlockSpec((1, H), lambda i: (0, 0)),    # b1: VMEM-resident
            pl.BlockSpec((nc, H), lambda i: (0, 0)),   # W2 ([out, in]): resident
            pl.BlockSpec((1, nc), lambda i: (0, 0)),   # b2: resident
        ],
        out_specs=pl.BlockSpec((tb, nc), lambda i: (i, 0)),
        compiler_params=pltpu.CompilerParams(
            dimension_semantics=("parallel",),
        ),
        cost_estimate=cost,
    )(xp, w1, b1, w2t, b2)

    return out[:B]


def init_params(key, input_size=768, hidden_size=512, num_classes=1):
    """Deterministic init mimicking PyTorch nn.Linear default (U(+/- 1/sqrt(fan_in)))."""
    k1, k2, k3, k4 = jax.random.split(key, 4)
    bound1 = 1.0 / jnp.sqrt(jnp.float32(input_size))
    bound2 = 1.0 / jnp.sqrt(jnp.float32(hidden_size))
    w1 = jax.random.uniform(k1, (input_size, hidden_size), jnp.float32, -bound1, bound1)
    b1 = jax.random.uniform(k2, (1, hidden_size), jnp.float32, -bound1, bound1)
    # W2 kept in PyTorch's native [out, in] layout.
    w2t = jax.random.uniform(k3, (num_classes, hidden_size), jnp.float32, -bound2, bound2)
    b2 = jax.random.uniform(k4, (1, num_classes), jnp.float32, -bound2, bound2)
    return w1, b1, w2t, b2


def reference_forward(x, w1, b1, w2t, b2):
    # Mirror the kernel's precision: bf16-rounded layer-1 operands, f32 math,
    # f32 layer-2 matvec (num_classes == 1 path).
    xb = x.astype(jnp.bfloat16).astype(jnp.float32)
    w1b = w1.astype(jnp.bfloat16).astype(jnp.float32)
    h = jnp.maximum(xb @ w1b + b1, 0.0)
    z = h @ w2t.T + b2
    return jax.nn.sigmoid(z)


if __name__ == "__main__":
    input_size, hidden_size, num_classes = 768, 512, 1
    batch = 20  # deliberately not a tile multiple to exercise pad + trim

    key = jax.random.PRNGKey(0)
    kx, kp = jax.random.split(key)
    x = jax.random.normal(kx, (batch, input_size), jnp.float32)
    w1, b1, w2t, b2 = init_params(kp, input_size, hidden_size, num_classes)

    # Small tile to exercise a multi-step grid at this small batch.
    fwd = jax.jit(functools.partial(simple_classifier_forward, tb=8))
    out = fwd(x, w1, b1, w2t, b2)
    out = jax.block_until_ready(out)

    ref = reference_forward(x, w1, b1, w2t, b2)
    assert out.shape == (batch, num_classes)
    assert jnp.allclose(out, ref, atol=1e-3, rtol=1e-3), "mismatch vs JAX reference"

    print("KERNEL_OK")
</pallas_src>

<mosaic_0001>
module attributes {stable_mosaic.version = 11 : i64} {
  func.func @mlp_kernel(%arg0: i32, %arg1: memref<8x768xf32, #tpu.memory_space<vmem>>, %arg2: memref<768x512xf32, #tpu.memory_space<vmem>>, %arg3: memref<1x512xf32, #tpu.memory_space<vmem>>, %arg4: memref<1x512xf32, #tpu.memory_space<vmem>>, %arg5: memref<1x1xf32, #tpu.memory_space<vmem>>, %arg6: memref<8x1xf32, #tpu.memory_space<vmem>>) attributes {dimension_semantics = [#tpu.dimension_semantics<parallel>], iteration_bounds = array<i64: 3>, scalar_prefetch = 0 : i64, scratch_operands = 0 : i64, tpu.core_type = #tpu.core_type<tc>, window_params = [{transform_indices = @transform_0, window_bounds = array<i64: 8, 768>}, {pipeline_mode = #tpu.pipeline_mode<synchronous>, transform_indices = @transform_1, window_bounds = array<i64: 768, 512>}, {pipeline_mode = #tpu.pipeline_mode<synchronous>, transform_indices = @transform_2, window_bounds = array<i64: 1, 512>}, {pipeline_mode = #tpu.pipeline_mode<synchronous>, transform_indices = @transform_3, window_bounds = array<i64: 1, 512>}, {pipeline_mode = #tpu.pipeline_mode<synchronous>, transform_indices = @transform_4, window_bounds = array<i64: 1, 1>}, {transform_indices = @transform_5, window_bounds = array<i64: 8, 1>}]} {
    %c0 = arith.constant 0 : index
    %c0_0 = arith.constant 0 : index
    %0 = vector.load %arg1[%c0, %c0_0] : memref<8x768xf32, #tpu.memory_space<vmem>>, vector<8x768xf32>
    %1 = arith.truncf %0 : vector<8x768xf32> to vector<8x768xbf16>
    %c0_1 = arith.constant 0 : index
    %c0_2 = arith.constant 0 : index
    %2 = vector.load %arg2[%c0_1, %c0_2] : memref<768x512xf32, #tpu.memory_space<vmem>>, vector<768x512xf32>
    %3 = arith.truncf %2 : vector<768x512xf32> to vector<768x512xbf16>
    %cst = arith.constant dense<0.000000e+00> : vector<8x512xf32>
    %4 = tpu.matmul %1, %3, %cst {dimension_numbers = #tpu.dot_dimension_numbers<[1], [0], [0], [1], [0, 0, 1, 1], [], []>} : vector<8x768xbf16>, vector<768x512xbf16>, vector<8x512xf32> -> vector<8x512xf32>
    %c0_3 = arith.constant 0 : index
    %c0_4 = arith.constant 0 : index
    %5 = vector.load %arg3[%c0_3, %c0_4] : memref<1x512xf32, #tpu.memory_space<vmem>>, vector<1x512xf32>
    %6 = vector.broadcast %5 : vector<1x512xf32> to vector<8x512xf32>
    %7 = arith.addf %4, %6 : vector<8x512xf32>
    %cst_5 = arith.constant 0.000000e+00 : f32
    %8 = vector.broadcast %cst_5 : f32 to vector<8x512xf32>
    %9 = arith.maximumf %7, %8 : vector<8x512xf32>
    %c0_6 = arith.constant 0 : index
    %c0_7 = arith.constant 0 : index
    %10 = vector.load %arg4[%c0_6, %c0_7] : memref<1x512xf32, #tpu.memory_space<vmem>>, vector<1x512xf32>
    %11 = vector.broadcast %10 : vector<1x512xf32> to vector<8x512xf32>
    %12 = arith.mulf %9, %11 : vector<8x512xf32>
    %cst_8 = arith.constant dense<0.000000e+00> : vector<8xf32>
    %13 = vector.multi_reduction <add>, %12, %cst_8 [1] : vector<8x512xf32> to vector<8xf32>
    %14 = vector.shape_cast %13 : vector<8xf32> to vector<8x1xf32>
    %c0_9 = arith.constant 0 : index
    %c0_10 = arith.constant 0 : index
    %15 = vector.load %arg5[%c0_9, %c0_10] : memref<1x1xf32, #tpu.memory_space<vmem>>, vector<1x1xf32>
    %16 = vector.broadcast %15 : vector<1x1xf32> to vector<8x1xf32>
    %17 = arith.addf %14, %16 : vector<8x1xf32>
    %18 = arith.negf %17 : vector<8x1xf32>
    %19 = math.exp %18 : vector<8x1xf32>
    %cst_11 = arith.constant 1.000000e+00 : f32
    %20 = vector.broadcast %cst_11 : f32 to vector<8x1xf32>
    %21 = arith.addf %20, %19 : vector<8x1xf32>
    %22 = arith.divf %20, %21 : vector<8x1xf32>
    %c0_12 = arith.constant 0 : index
    %c0_13 = arith.constant 0 : index
    %23 = vector.load %arg6[%c0_12, %c0_13] : memref<8x1xf32, #tpu.memory_space<vmem>>, vector<8x1xf32>
    tpu.vector_store %arg6[%c0_12, %c0_13], %22 {strides = array<i32>} : memref<8x1xf32, #tpu.memory_space<vmem>>, vector<8x1xf32>,
    return
  }
  func.func @transform_0(%arg0: i32) -> (i32, i32) {
    %c0_i32 = arith.constant 0 : i32
    %c0_i32_0 = arith.constant 0 : i32
    return %arg0, %c0_i32 : i32, i32
  }
  func.func @transform_1(%arg0: i32) -> (i32, i32) {
    %c0_i32 = arith.constant 0 : i32
    %c0_i32_0 = arith.constant 0 : i32
    %c0_i32_1 = arith.constant 0 : i32
    return %c0_i32, %c0_i32_0 : i32, i32
  }
  func.func @transform_2(%arg0: i32) -> (i32, i32) {
    %c0_i32 = arith.constant 0 : i32
    %c0_i32_0 = arith.constant 0 : i32
    %c0_i32_1 = arith.constant 0 : i32
    return %c0_i32, %c0_i32_0 : i32, i32
  }
  func.func @transform_3(%arg0: i32) -> (i32, i32) {
    %c0_i32 = arith.constant 0 : i32
    %c0_i32_0 = arith.constant 0 : i32
    %c0_i32_1 = arith.constant 0 : i32
    return %c0_i32, %c0_i32_0 : i32, i32
  }
  func.func @transform_4(%arg0: i32) -> (i32, i32) {
    %c0_i32 = arith.constant 0 : i32
    %c0_i32_0 = arith.constant 0 : i32
    %c0_i32_1 = arith.constant 0 : i32
    return %c0_i32, %c0_i32_0 : i32, i32
  }
  func.func @transform_5(%arg0: i32) -> (i32, i32) {
    %c0_i32 = arith.constant 0 : i32
    %c0_i32_0 = arith.constant 0 : i32
    return %arg0, %c0_i32 : i32, i32
  }
}

</mosaic_0001>

<llo_original>
// kernel: simple_classifier_forward.1
$region0: #{simple_classifier_forward.1}
  #allocation0 [shape = 'u32[]', space=smem, size = 0x4, offset = 0x4, fixed_abs, tag = 'smem constant byte address 0x4 - core index']
  #allocation1 [shape = 'u32[144,128]{1,0:T(1,128)}', space=vmem, size = 0x12000, scoped, tag = 'internal scratch']
  #allocation2 [shape = 'f32[1,1]{1,0:T(1,128)S(1)}', space=vmem, size = 0x200, scoped, tag = 'scoped memory for simple_classifier_forward.1']
  %s0 = inlined_call_operand.vmem [shape: f32[24,768], index: 0, kind: input, shape index: {}]
  %s1 = inlined_call_operand.hbm [shape: f32[768,512], index: 1, kind: input, shape index: {}]
  %s2 = inlined_call_operand.hbm [shape: f32[1,512], index: 2, kind: input, shape index: {}]
  %s3 = inlined_call_operand.hbm [shape: f32[1,512], index: 3, kind: input, shape index: {}]
  %s4 = inlined_call_operand.<no memory space> [shape: f32[1,1], index: 4, kind: input, shape index: {}]
  %s5 = inlined_call_operand.vmem [shape: f32[24,1], index: 5, kind: output, shape index: {}]
  %s6 = sld [smem:[#allocation0]]
  $region65: #{simple_classifier_forward.1} parent=0
    _
  %s8 = ssub.s32 1, %s6
  %s9 = scalar_select 0, %s8, %s6
  %v10 = vstv %s4
  %11 = vst [vmem:[#allocation2] sm:$0x1] %v10
  $region1: #{simple_classifier_forward.1} parent=0
    #allocation3 [shape = 'u8[1572864]{0}', space=vmem, size = 0x180000, scoped, tag = 'input window, operand 1, single buffered']
    #allocation4 [shape = 's32[2]{0}', space=sflag, size = 0x8, scoped, tag = 'scoped memory for simple_classifier_forward.1']
    #allocation5 [shape = 'u8[2048]{0}', space=vmem, size = 0x800, scoped, tag = 'input window, operand 2, single buffered']
    #allocation6 [shape = 's32[1]{0}', space=sflag, size = 0x4, scoped, tag = 'scoped memory for simple_classifier_forward.1']
    #allocation7 [shape = 'u8[2048]{0}', space=vmem, size = 0x800, scoped, tag = 'input window, operand 3, single buffered']
    %12 = vsyncpa [#allocation4], 0
    %13 = vsyncpa [#allocation6], 0
    loop: start=0, step=1, limit=5
    $region2: #{simple_classifier_forward.1} parent=1 // loop_pre_header
      _
    $region3: #{simple_classifier_forward.1} parent=1 // loop_header
      %s15 = sphi 0, %s19
      %p16 = scmp.ge.s32.totalorder %s15, 5
      %s25 = sphi 0, %s27
      %s28 = sphi 0, %s25
      %s29 = sphi 0, %s28
      %s45 = sphi 0, %s29
      %s49 = sphi 0, %s49
      %s51 = sphi 0, %s49
      %s52 = sphi 0, %s51
      %s66 = sphi 0, %s52
      %s70 = sphi 0, %s70
      %s72 = sphi 0, %s70
      %s73 = sphi 0, %s72
      %s87 = sphi 0, %s73
      %s91 = sphi 0, %s91
      %s93 = sphi 0, %s91
      %s94 = sphi 0, %s93
      %s108 = sphi 0, %s94
      %s112 = sphi 0, %s112
      %s114 = sphi 0, %s112
      %s115 = sphi 0, %s114
      %s129 = sphi 0, %s115
      %s135 = sphi 0, %s137
      %s138 = sphi 0, %s135
      %s139 = sphi 0, %s138
      %s155 = sphi 0, %s139
    $region4: #{simple_classifier_forward.1} parent=1 // loop_header_branch
      %18 = sbr.rel (%p16) target = $region8
    $region5: #{simple_classifier_forward.1} parent=1 // loop_body
      %s20 = ssub.s32 %s15, 1
      %s21 = ssub.s32 %s15, 2
      %s22 = sadd.s32 %s15, 1
      %s23 = ssub.s32 %s15, %s22
      %p24 = scmp.eq.s32.totalorder %s23, 0
      %s26 = sadd.s32 %s25, 1
      %s27 = scalar_select %p24, %s25, %s26
      %p30 = pneg %p24
      %p31 = scmp.eq.s32.totalorder %s15, 2
      %p32 = por %p30, %p31
      %p33 = scmp.ne.s32.totalorder %s25, %s28
      %p34 = scmp.eq.s32.totalorder %s15, 0
      %p35 = por %p33, %p34
      %p36 = scmp.ne.s32.totalorder %s25, %s28
      %p37 = scmp.eq.s32.totalorder %s20, 2
      %p38 = por %p36, %p37
      %p39 = scmp.ne.s32.totalorder %s28, %s29
      %p40 = scmp.eq.s32.totalorder %s20, 0
      %p41 = por %p39, %p40
      %p42 = scmp.ne.s32.totalorder %s28, %s29
      %p43 = scmp.eq.s32.totalorder %s21, 2
      %p44 = por %p42, %p43
      %p46 = scmp.ne.s32.totalorder %s29, %s45
      %p47 = scmp.eq.s32.totalorder %s21, 0
      %p48 = por %p46, %p47
      %s50 = sadd.s32 %s49, 1
      %p53 = scmp.eq.s32.totalorder %s15, 2
      %p54 = scmp.ne.s32.totalorder %s49, %s51
      %p55 = scmp.eq.s32.totalorder %s15, 0
      %p56 = por %p54, %p55
      %p57 = scmp.ne.s32.totalorder %s49, %s51
      %p58 = scmp.eq.s32.totalorder %s20, 2
      %p59 = por %p57, %p58
      %p60 = scmp.ne.s32.totalorder %s51, %s52
      %p61 = scmp.eq.s32.totalorder %s20, 0
      %p62 = por %p60, %p61
      %p63 = scmp.ne.s32.totalorder %s51, %s52
      %p64 = scmp.eq.s32.totalorder %s21, 2
      %p65 = por %p63, %p64
      %p67 = scmp.ne.s32.totalorder %s52, %s66
      %p68 = scmp.eq.s32.totalorder %s21, 0
      %p69 = por %p67, %p68
      %s71 = sadd.s32 %s70, 1
      %p74 = scmp.eq.s32.totalorder %s15, 2
      %p75 = scmp.ne.s32.totalorder %s70, %s72
      %p76 = scmp.eq.s32.totalorder %s15, 0
      %p77 = por %p75, %p76
      %p78 = scmp.ne.s32.totalorder %s70, %s72
      %p79 = scmp.eq.s32.totalorder %s20, 2
      %p80 = por %p78, %p79
      %p81 = scmp.ne.s32.totalorder %s72, %s73
      %p82 = scmp.eq.s32.totalorder %s20, 0
      %p83 = por %p81, %p82
      %p84 = scmp.ne.s32.totalorder %s72, %s73
      %p85 = scmp.eq.s32.totalorder %s21, 2
      %p86 = por %p84, %p85
      %p88 = scmp.ne.s32.totalorder %s73, %s87
      %p89 = scmp.eq.s32.totalorder %s21, 0
      %p90 = por %p88, %p89
      %s92 = sadd.s32 %s91, 1
      %p95 = scmp.eq.s32.totalorder %s15, 2
      %p96 = scmp.ne.s32.totalorder %s91, %s93
      %p97 = scmp.eq.s32.totalorder %s15, 0
      %p98 = por %p96, %p97
      %p99 = scmp.ne.s32.totalorder %s91, %s93
      %p100 = scmp.eq.s32.totalorder %s20, 2
      %p101 = por %p99, %p100
      %p102 = scmp.ne.s32.totalorder %s93, %s94
      %p103 = scmp.eq.s32.totalorder %s20, 0
      %p104 = por %p102, %p103
      %p105 = scmp.ne.s32.totalorder %s93, %s94
      %p106 = scmp.eq.s32.totalorder %s21, 2
      %p107 = por %p105, %p106
      %p109 = scmp.ne.s32.totalorder %s94, %s108
      %p110 = scmp.eq.s32.totalorder %s21, 0
      %p111 = por %p109, %p110
      %s113 = sadd.s32 %s112, 1
      %p116 = scmp.eq.s32.totalorder %s15, 2
      %p117 = scmp.ne.s32.totalorder %s112, %s114
      %p118 = scmp.eq.s32.totalorder %s15, 0
      %p119 = por %p117, %p118
      %p120 = scmp.ne.s32.totalorder %s112, %s114
      %p121 = scmp.eq.s32.totalorder %s20, 2
      %p122 = por %p120, %p121
      %p123 = scmp.ne.s32.totalorder %s114, %s115
      %p124 = scmp.eq.s32.totalorder %s20, 0
      %p125 = por %p123, %p124
      %p126 = scmp.ne.s32.totalorder %s114, %s115
      %p127 = scmp.eq.s32.totalorder %s21, 2
      %p128 = por %p126, %p127
      %p130 = scmp.ne.s32.totalorder %s115, %s129
      %p131 = scmp.eq.s32.totalorder %s21, 0
      %p132 = por %p130, %p131
      %s133 = ssub.s32 %s15, %s22
      %p134 = scmp.eq.s32.totalorder %s133, 0
      %s136 = sadd.s32 %s135, 1
      %s137 = scalar_select %p134, %s135, %s136
      %p140 = pneg %p134
      %p141 = scmp.eq.s32.totalorder %s15, 2
      %p142 = por %p140, %p141
      %p143 = scmp.ne.s32.totalorder %s135, %s138
      %p144 = scmp.eq.s32.totalorder %s15, 0
      %p145 = por %p143, %p144
      %p146 = scmp.ne.s32.totalorder %s135, %s138
      %p147 = scmp.eq.s32.totalorder %s20, 2
      %p148 = por %p146, %p147
      %p149 = scmp.ne.s32.totalorder %s138, %s139
      %p150 = scmp.eq.s32.totalorder %s20, 0
      %p151 = por %p149, %p150
      %p152 = scmp.ne.s32.totalorder %s138, %s139
      %p153 = scmp.eq.s32.totalorder %s21, 2
      %p154 = por %p152, %p153
      %p156 = scmp.ne.s32.totalorder %s139, %s155
      %p157 = scmp.eq.s32.totalorder %s21, 0
      %p158 = por %p156, %p157
      %p159 = scmp.le.s32.totalorder 1, %s15
      %p160 = scmp.lt.s32.totalorder %s15, 4
      %p161 = pnand %p159, %p160
      %p162 = pneg %p161
      // Predicated region
      $region9: #{simple_classifier_forward.1} parent=5 // pred_check
        _
      $region10: #{simple_classifier_forward.1} parent=5 // pred_check_branch
        %164 = sbr.rel (%p161) target = $region12
      $region11: #{simple_classifier_forward.1} parent=5 // pred_region
        %s165 = ssub.s32 %s15, 1
        // Predicated region
        $region13: #{simple_classifier_forward.1} parent=11 // pred_check
          %p166 = pneg %p62
        $region14: #{simple_classifier_forward.1} parent=11 // pred_check_branch
          %168 = sbr.rel (%p166) target = $region16
        $region15: #{simple_classifier_forward.1} parent=11 // pred_region
          %s170 = ssub.s32 49152, 49152
          %171 = vsyncadd [#allocation4], %s170
          %s172 = sshll.u32 [#allocation3], 4
          %s173 = int_to_ptr.vmem [resolvable:$true] %s172
          %178 = dma.hbm_to_vmem [thread:$0]  %s1, 49152, %s173, [#allocation4], 512, 512, 32
        $region16: #{simple_classifier_forward.1} parent=11 // pred_fallthru
          _
        // Predicated region
        $region17: #{simple_classifier_forward.1} parent=11 // pred_check
          %p179 = pneg %p83
        $region18: #{simple_classifier_forward.1} parent=11 // pred_check_branch
          %181 = sbr.rel (%p179) target = $region20
        $region19: #{simple_classifier_forward.1} parent=11 // pred_region
          %s183 = ssub.s32 64, 64
          %184 = vsyncadd [#allocation6], %s183
          %s186 = sshll.u32 [#allocation5], 4
          %s187 = int_to_ptr.vmem [resolvable:$true] %s186
          %189 = dma.hbm_to_vmem [thread:$0]  %s2, 64, %s187, [#allocation6]
        $region20: #{simple_classifier_forward.1} parent=11 // pred_fallthru
          _
        // Predicated region
        $region21: #{simple_classifier_forward.1} parent=11 // pred_check
          %p190 = pneg %p104
        $region22: #{simple_classifier_forward.1} parent=11 // pred_check_branch
          %192 = sbr.rel (%p190) target = $region24
        $region23: #{simple_classifier_forward.1} parent=11 // pred_region
          %s194 = ssub.s32 64, 64
          %195 = vsyncadd [#allocation6], %s194
          %s197 = sshll.u32 [#allocation7], 4
          %s198 = int_to_ptr.vmem [resolvable:$true] %s197
          %200 = dma.hbm_to_vmem [thread:$0]  %s3, 64, %s198, [#allocation6]
        $region24: #{simple_classifier_forward.1} parent=11 // pred_fallthru
          _
        // Predicated region
        $region25: #{simple_classifier_forward.1} parent=11 // pred_check
          %p201 = pneg %p125
        $region26: #{simple_classifier_forward.1} parent=11 // pred_check_branch
          %203 = sbr.rel (%p201) target = $region28
        $region27: #{simple_classifier_forward.1} parent=11 // pred_region
          _
        $region28: #{simple_classifier_forward.1} parent=11 // pred_fallthru
          _
      $region12: #{simple_classifier_forward.1} parent=5 // pred_fallthru
        _
      %p204 = scmp.lt.s32.totalorder %s15, 3
      // Predicated region
      $region29: #{simple_classifier_forward.1} parent=5 // pred_check
        %p205 = pneg %p204
      $region30: #{simple_classifier_forward.1} parent=5 // pred_check_branch
        %207 = sbr.rel (%p205) target = $region32
      $region31: #{simple_classifier_forward.1} parent=5 // pred_region
        // Predicated region
        $region33: #{simple_classifier_forward.1} parent=31 // pred_check
          %p208 = pneg %p35
        $region34: #{simple_classifier_forward.1} parent=31 // pred_check_branch
          %210 = sbr.rel (%p208) target = $region36
        $region35: #{simple_classifier_forward.1} parent=31 // pred_region
          %p211 = scmp.lt.s32.totalorder %s15, 2
          %s212 = scalar_select %p211, %s15, 2
          %s213 = smul.addr %s212, 6
          %s214 = smul.addr %s213, 8
          %s215 = scalar_lea.vmem %s0, %s214
        $region36: #{simple_classifier_forward.1} parent=31 // pred_fallthru
          _
      $region32: #{simple_classifier_forward.1} parent=5 // pred_fallthru
        _
      %p216 = scmp.le.s32.totalorder 1, %s15
      %p217 = scmp.lt.s32.totalorder %s15, 4
      %p218 = pnand %p216, %p217
      %p219 = pneg %p218
      // Predicated region
      $region37: #{simple_classifier_forward.1} parent=5 // pred_check
        _
      $region38: #{simple_classifier_forward.1} parent=5 // pred_check_branch
        %221 = sbr.rel (%p218) target = $region40
      $region39: #{simple_classifier_forward.1} parent=5 // pred_region
        %s222 = ssub.s32 %s15, 1
        // Predicated region
        $region41: #{simple_classifier_forward.1} parent=39 // pred_check
          %p223 = pneg %p62
        $region42: #{simple_classifier_forward.1} parent=39 // pred_check_branch
          %225 = sbr.rel (%p223) target = $region44
        $region43: #{simple_classifier_forward.1} parent=39 // pred_region
          %226 = dma.done [#allocation4], 49152
        $region44: #{simple_classifier_forward.1} parent=39 // pred_fallthru
          _
        // Predicated region
        $region45: #{simple_classifier_forward.1} parent=39 // pred_check
          %p227 = pneg %p83
        $region46: #{simple_classifier_forward.1} parent=39 // pred_check_branch
          %229 = sbr.rel (%p227) target = $region48
        $region47: #{simple_classifier_forward.1} parent=39 // pred_region
          %230 = dma.done [#allocation6], 64
        $region48: #{simple_classifier_forward.1} parent=39 // pred_fallthru
          _
        // Predicated region
        $region49: #{simple_classifier_forward.1} parent=39 // pred_check
          %p231 = pneg %p104
        $region50: #{simple_classifier_forward.1} parent=39 // pred_check_branch
          %233 = sbr.rel (%p231) target = $region52
        $region51: #{simple_classifier_forward.1} parent=39 // pred_region
          %234 = dma.done [#allocation6], 64
        $region52: #{simple_classifier_forward.1} parent=39 // pred_fallthru
          _
        %p235 = scmp.lt.s32.totalorder %s20, 2
        %s236 = scalar_select %p235, %s20, 2
        %s237 = smul.addr %s236, 6
        %s238 = smul.addr %s237, 8
        %s239 = scalar_lea.vmem %s0, %s238
        %p240 = pneg %p41
        %p241 = pneg %p38
        %p242 = pneg %p62
        %p243 = pneg %p59
        %p244 = pneg %p83
        %p245 = pneg %p80
        %p246 = pneg %p104
        %p247 = pneg %p101
        %p248 = pneg %p125
        %p249 = pneg %p122
        %p250 = pneg %p151
        %p251 = pneg %p148
        %p252 = scmp.lt.s32.totalorder %s20, 2
        %s253 = scalar_select %p252, %s20, 2
        %s254 = smul.addr %s253, 8
        %s255 = scalar_lea.vmem %s5, %s254
        %p256 = scmp.lt.s32.totalorder %s20, 2
        %s257 = scalar_select %p256, %s20, 2
        %s258 = smul.addr %s257, 6
        %s259 = smul.addr %s258, 8
        %s260 = scalar_lea.vmem %s0, %s259
        %p261 = scmp.lt.s32.totalorder %s20, 2
        %s262 = scalar_select %p261, %s20, 2
        %s263 = smul.addr %s262, 8
        %s264 = scalar_lea.vmem %s5, %s263
        %v265 = vld [vmem:[%s260] sm:$0xff]
        %v266 = vld [vmem:[%s260 + $0x8] sm:$0xff]
        %v267 = vld [vmem:[%s260 + $0x10] sm:$0xff]
        %v268 = vld [vmem:[%s260 + $0x18] sm:$0xff]
        %v269 = vld [vmem:[%s260 + $0x20] sm:$0xff]
        %v270 = vld [vmem:[%s260 + $0x28] sm:$0xff]
        %v271 = vpack.c.bf16 %v265, %v265
        %v272 = vpack.c.bf16 %v266, %v266
        %v273 = vpack.c.bf16 %v267, %v267
        %v274 = vpack.c.bf16 %v268, %v268
        %v275 = vpack.c.bf16 %v269, %v269
        %v276 = vpack.c.bf16 %v270, %v270
        %v277 = vld [vmem:[#allocation3] sm:$0xff]
        %v278 = vld [vmem:[#allocation3 + $0x8] sm:$0xff]
        %v279 = vld [vmem:[#allocation3 + $0x10] sm:$0xff]
        %v280 = vld [vmem:[#allocation3 + $0x18] sm:$0xff]
        %v281 = vld [vmem:[#allocation3 + $0x20] sm:$0xff]
        %v282 = vld [vmem:[#allocation3 + $0x28] sm:$0xff]
        %v283 = vld [vmem:[#allocation3 + $0x30] sm:$0xff]
        %v284 = vld [vmem:[#allocation3 + $0x38] sm:$0xff]
        %v285 = vld [vmem:[#allocation3 + $0x40] sm:$0xff]
        %v286 = vld [vmem:[#allocation3 + $0x48] sm:$0xff]
        %v287 = vld [vmem:[#allocation3 + $0x50] sm:$0xff]
        %v288 = vld [vmem:[#allocation3 + $0x58] sm:$0xff]
        %v289 = vld [vmem:[#allocation3 + $0x60] sm:$0xff]
        %v290 = vld [vmem:[#allocation3 + $0x68] sm:$0xff]
        %v291 = vld [vmem:[#allocation3 + $0x70] sm:$0xff]
        %v292 = vld [vmem:[#allocation3 + $0x78] sm:$0xff]
        %v293 = vld [vmem:[#allocation3 + $0x80] sm:$0xff]
        %v294 = vld [vmem:[#allocation3 + $0x88] sm:$0xff]
        %v295 = vld [vmem:[#allocation3 + $0x90] sm:$0xff]
        %v296 = vld [vmem:[#allocation3 + $0x98] sm:$0xff]
        %v297 = vld [vmem:[#allocation3 + $0xa0] sm:$0xff]
        %v298 = vld [vmem:[#allocation3 + $0xa8] sm:$0xff]
        %v299 = vld [vmem:[#allocation3 + $0xb0] sm:$0xff]
        %v300 = vld [vmem:[#allocation3 + $0xb8] sm:$0xff]
        %v301 = vld [vmem:[#allocation3 + $0xc0] sm:$0xff]
        %v302 = vld [vmem:[#allocation3 + $0xc8] sm:$0xff]
        %v303 = vld [vmem:[#allocation3 + $0xd0] sm:$0xff]
        %v304 = vld [vmem:[#allocation3 + $0xd8] sm:$0xff]
        %v305 = vld [vmem:[#allocation3 + $0xe0] sm:$0xff]
        %v306 = vld [vmem:[#allocation3 + $0xe8] sm:$0xff]
        %v307 = vld [vmem:[#allocation3 + $0xf0] sm:$0xff]
        %v308 = vld [vmem:[#allocation3 + $0xf8] sm:$0xff]
        %v309 = vld [vmem:[#allocation3 + $0x100] sm:$0xff]
        %v310 = vld [vmem:[#allocation3 + $0x108] sm:$0xff]
        %v311 = vld [vmem:[#allocation3 + $0x110] sm:$0xff]
        %v312 = vld [vmem:[#allocation3 + $0x118] sm:$0xff]
        %v313 = vld [vmem:[#allocation3 + $0x120] sm:$0xff]
        %v314 = vld [vmem:[#allocation3 + $0x128] sm:$0xff]
        %v315 = vld [vmem:[#allocation3 + $0x130] sm:$0xff]
        %v316 = vld [vmem:[#allocation3 + $0x138] sm:$0xff]
        %v317 = vld [vmem:[#allocation3 + $0x140] sm:$0xff]
        %v318 = vld [vmem:[#allocation3 + $0x148] sm:$0xff]
        %v319 = vld [vmem:[#allocation3 + $0x150] sm:$0xff]
        %v320 = vld [vmem:[#allocation3 + $0x158] sm:$0xff]
        %v321 = vld [vmem:[#allocation3 + $0x160] sm:$0xff]
        %v322 = vld [vmem:[#allocation3 + $0x168] sm:$0xff]
        %v323 = vld [vmem:[#allocation3 + $0x170] sm:$0xff]
        %v324 = vld [vmem:[#allocation3 + $0x178] sm:$0xff]
        %v325 = vld [vmem:[#allocation3 + $0x180] sm:$0xff]
        %v326 = vld [vmem:[#allocation3 + $0x188] sm:$0xff]
        %v327 = vld [vmem:[#allocation3 + $0x190] sm:$0xff]
        %v328 = vld [vmem:[#allocation3 + $0x198] sm:$0xff]
        %v329 = vld [vmem:[#allocation3 + $0x1a0] sm:$0xff]
        %v330 = vld [vmem:[#allocation3 + $0x1a8] sm:$0xff]
        %v331 = vld [vmem:[#allocation3 + $0x1b0] sm:$0xff]
        %v332 = vld [vmem:[#allocation3 + $0x1b8] sm:$0xff]
        %v333 = vld [vmem:[#allocation3 + $0x1c0] sm:$0xff]
        %v334 = vld [vmem:[#allocation3 + $0x1c8] sm:$0xff]
        %v335 = vld [vmem:[#allocation3 + $0x1d0] sm:$0xff]
        %v336 = vld [vmem:[#allocation3 + $0x1d8] sm:$0xff]
        %v337 = vld [vmem:[#allocation3 + $0x1e0] sm:$0xff]
        %v338 = vld [vmem:[#allocation3 + $0x1e8] sm:$0xff]
        %v339 = vld [vmem:[#allocation3 + $0x1f0] sm:$0xff]
        %v340 = vld [vmem:[#allocation3 + $0x1f8] sm:$0xff]
        %v341 = vld [vmem:[#allocation3 + $0x200] sm:$0xff]
        %v342 = vld [vmem:[#allocation3 + $0x208] sm:$0xff]
        %v343 = vld [vmem:[#allocation3 + $0x210] sm:$0xff]
        %v344 = vld [vmem:[#allocation3 + $0x218] sm:$0xff]
        %v345 = vld [vmem:[#allocation3 + $0x220] sm:$0xff]
        %v346 = vld [vmem:[#allocation3 + $0x228] sm:$0xff]
        %v347 = vld [vmem:[#allocation3 + $0x230] sm:$0xff]
        %v348 = vld [vmem:[#allocation3 + $0x238] sm:$0xff]
        %v349 = vld [vmem:[#allocation3 + $0x240] sm:$0xff]
        %v350 = vld [vmem:[#allocation3 + $0x248] sm:$0xff]
        %v351 = vld [vmem:[#allocation3 + $0x250] sm:$0xff]
        %v352 = vld [vmem:[#allocation3 + $0x258] sm:$0xff]
        %v353 = vld [vmem:[#allocation3 + $0x260] sm:$0xff]
        %v354 = vld [vmem:[#allocation3 + $0x268] sm:$0xff]
        %v355 = vld [vmem:[#allocation3 + $0x270] sm:$0xff]
        %v356 = vld [vmem:[#allocation3 + $0x278] sm:$0xff]
        %v357 = vld [vmem:[#allocation3 + $0x280] sm:$0xff]
        %v358 = vld [vmem:[#allocation3 + $0x288] sm:$0xff]
        %v359 = vld [vmem:[#allocation3 + $0x290] sm:$0xff]
        %v360 = vld [vmem:[#allocation3 + $0x298] sm:$0xff]
        %v361 = vld [vmem:[#allocation3 + $0x2a0] sm:$0xff]
        %v362 = vld [vmem:[#allocation3 + $0x2a8] sm:$0xff]
        %v363 = vld [vmem:[#allocation3 + $0x2b0] sm:$0xff]
        %v364 = vld [vmem:[#allocation3 + $0x2b8] sm:$0xff]
        %v365 = vld [vmem:[#allocation3 + $0x2c0] sm:$0xff]
        %v366 = vld [vmem:[#allocation3 + $0x2c8] sm:$0xff]
        %v367 = vld [vmem:[#allocation3 + $0x2d0] sm:$0xff]
        %v368 = vld [vmem:[#allocation3 + $0x2d8] sm:$0xff]
        %v369 = vld [vmem:[#allocation3 + $0x2e0] sm:$0xff]
        %v370 = vld [vmem:[#allocation3 + $0x2e8] sm:$0xff]
        %v371 = vld [vmem:[#allocation3 + $0x2f0] sm:$0xff]
        %v372 = vld [vmem:[#allocation3 + $0x2f8] sm:$0xff]
        %v373 = vld [vmem:[#allocation3 + $0x300] sm:$0xff]
        %v374 = vld [vmem:[#allocation3 + $0x308] sm:$0xff]
        %v375 = vld [vmem:[#allocation3 + $0x310] sm:$0xff]
        %v376 = vld [vmem:[#allocation3 + $0x318] sm:$0xff]
        %v377 = vld [vmem:[#allocation3 + $0x320] sm:$0xff]
        %v378 = vld [vmem:[#allocation3 + $0x328] sm:$0xff]
        %v379 = vld [vmem:[#allocation3 + $0x330] sm:$0xff]
        %v380 = vld [vmem:[#allocation3 + $0x338] sm:$0xff]
        %v381 = vld [vmem:[#allocation3 + $0x340] sm:$0xff]
        %v382 = vld [vmem:[#allocation3 + $0x348] sm:$0xff]
        %v383 = vld [vmem:[#allocation3 + $0x350] sm:$0xff]
        %v384 = vld [vmem:[#allocation3 + $0x358] sm:$0xff]
        %v385 = vld [vmem:[#allocation3 + $0x360] sm:$0xff]
        %v386 = vld [vmem:[#allocation3 + $0x368] sm:$0xff]
        %v387 = vld [vmem:[#allocation3 + $0x370] sm:$0xff]
        %v388 = vld [vmem:[#allocation3 + $0x378] sm:$0xff]
        %v389 = vld [vmem:[#allocation3 + $0x380] sm:$0xff]
        %v390 = vld [vmem:[#allocation3 + $0x388] sm:$0xff]
        %v391 = vld [vmem:[#allocation3 + $0x390] sm:$0xff]
        %v392 = vld [vmem:[#allocation3 + $0x398] sm:$0xff]
        %v393 = vld [vmem:[#allocation3 + $0x3a0] sm:$0xff]
        %v394 = vld [vmem:[#allocation3 + $0x3a8] sm:$0xff]
        %v395 = vld [vmem:[#allocation3 + $0x3b0] sm:$0xff]
        %v396 = vld [vmem:[#allocation3 + $0x3b8] sm:$0xff]
        %v397 = vld [vmem:[#allocation3 + $0x3c0] sm:$0xff]
        %v398 = vld [vmem:[#allocation3 + $0x3c8] sm:$0xff]
        %v399 = vld [vmem:[#allocation3 + $0x3d0] sm:$0xff]
        %v400 = vld [vmem:[#allocation3 + $0x3d8] sm:$0xff]
        %v401 = vld [vmem:[#allocation3 + $0x3e0] sm:$0xff]
        %v402 = vld [vmem:[#allocation3 + $0x3e8] sm:$0xff]
        %v403 = vld [vmem:[#allocation3 + $0x3f0] sm:$0xff]
        %v404 = vld [vmem:[#allocation3 + $0x3f8] sm:$0xff]
        %v405 = vld [vmem:[#allocation3 + $0x400] sm:$0xff]
        %v406 = vld [vmem:[#allocation3 + $0x408] sm:$0xff]
        %v407 = vld [vmem:[#allocation3 + $0x410] sm:$0xff]
        %v408 = vld [vmem:[#allocation3 + $0x418] sm:$0xff]
        %v409 = vld [vmem:[#allocation3 + $0x420] sm:$0xff]
        %v410 = vld [vmem:[#allocation3 + $0x428] sm:$0xff]
        %v411 = vld [vmem:[#allocation3 + $0x430] sm:$0xff]
        %v412 = vld [vmem:[#allocation3 + $0x438] sm:$0xff]
        %v413 = vld [vmem:[#allocation3 + $0x440] sm:$0xff]
        %v414 = vld [vmem:[#allocation3 + $0x448] sm:$0xff]
        %v415 = vld [vmem:[#allocation3 + $0x450] sm:$0xff]
        %v416 = vld [vmem:[#allocation3 + $0x458] sm:$0xff]
        %v417 = vld [vmem:[#allocation3 + $0x460] sm:$0xff]
        %v418 = vld [vmem:[#allocation3 + $0x468] sm:$0xff]
        %v419 = vld [vmem:[#allocation3 + $0x470] sm:$0xff]
        %v420 = vld [vmem:[#allocation3 + $0x478] sm:$0xff]
        %v421 = vld [vmem:[#allocation3 + $0x480] sm:$0xff]
        %v422 = vld [vmem:[#allocation3 + $0x488] sm:$0xff]
        %v423 = vld [vmem:[#allocation3 + $0x490] sm:$0xff]
        %v424 = vld [vmem:[#allocation3 + $0x498] sm:$0xff]
        %v425 = vld [vmem:[#allocation3 + $0x4a0] sm:$0xff]
        %v426 = vld [vmem:[#allocation3 + $0x4a8] sm:$0xff]
        %v427 = vld [vmem:[#allocation3 + $0x4b0] sm:$0xff]
        %v428 = vld [vmem:[#allocation3 + $0x4b8] sm:$0xff]
        %v429 = vld [vmem:[#allocation3 + $0x4c0] sm:$0xff]
        %v430 = vld [vmem:[#allocation3 + $0x4c8] sm:$0xff]
        %v431 = vld [vmem:[#allocation3 + $0x4d0] sm:$0xff]
        %v432 = vld [vmem:[#allocation3 + $0x4d8] sm:$0xff]
        %v433 = vld [vmem:[#allocation3 + $0x4e0] sm:$0xff]
        %v434 = vld [vmem:[#allocation3 + $0x4e8] sm:$0xff]
        %v435 = vld [vmem:[#allocation3 + $0x4f0] sm:$0xff]
        %v436 = vld [vmem:[#allocation3 + $0x4f8] sm:$0xff]
        %v437 = vld [vmem:[#allocation3 + $0x500] sm:$0xff]
        %v438 = vld [vmem:[#allocation3 + $0x508] sm:$0xff]
        %v439 = vld [vmem:[#allocation3 + $0x510] sm:$0xff]
        %v440 = vld [vmem:[#allocation3 + $0x518] sm:$0xff]
        %v441 = vld [vmem:[#allocation3 + $0x520] sm:$0xff]
        %v442 = vld [vmem:[#allocation3 + $0x528] sm:$0xff]
        %v443 = vld [vmem:[#allocation3 + $0x530] sm:$0xff]
        %v444 = vld [vmem:[#allocation3 + $0x538] sm:$0xff]
        %v445 = vld [vmem:[#allocation3 + $0x540] sm:$0xff]
        %v446 = vld [vmem:[#allocation3 + $0x548] sm:$0xff]
        %v447 = vld [vmem:[#allocation3 + $0x550] sm:$0xff]
        %v448 = vld [vmem:[#allocation3 + $0x558] sm:$0xff]
        %v449 = vld [vmem:[#allocation3 + $0x560] sm:$0xff]
        %v450 = vld [vmem:[#allocation3 + $0x568] sm:$0xff]
        %v451 = vld [vmem:[#allocation3 + $0x570] sm:$0xff]
        %v452 = vld [vmem:[#allocation3 + $0x578] sm:$0xff]
        %v453 = vld [vmem:[#allocation3 + $0x580] sm:$0xff]
        %v454 = vld [vmem:[#allocation3 + $0x588] sm:$0xff]
        %v455 = vld [vmem:[#allocation3 + $0x590] sm:$0xff]
        %v456 = vld [vmem:[#allocation3 + $0x598] sm:$0xff]
        %v457 = vld [vmem:[#allocation3 + $0x5a0] sm:$0xff]
        %v458 = vld [vmem:[#allocation3 + $0x5a8] sm:$0xff]
        %v459 = vld [vmem:[#allocation3 + $0x5b0] sm:$0xff]
        %v460 = vld [vmem:[#allocation3 + $0x5b8] sm:$0xff]
        %v461 = vld [vmem:[#allocation3 + $0x5c0] sm:$0xff]
        %v462 = vld [vmem:[#allocation3 + $0x5c8] sm:$0xff]
        %v463 = vld [vmem:[#allocation3 + $0x5d0] sm:$0xff]
        %v464 = vld [vmem:[#allocation3 + $0x5d8] sm:$0xff]
        %v465 = vld [vmem:[#allocation3 + $0x5e0] sm:$0xff]
        %v466 = vld [vmem:[#allocation3 + $0x5e8] sm:$0xff]
        %v467 = vld [vmem:[#allocation3 + $0x5f0] sm:$0xff]
        %v468 = vld [vmem:[#allocation3 + $0x5f8] sm:$0xff]
        %v469 = vld [vmem:[#allocation3 + $0x600] sm:$0xff]
        %v470 = vld [vmem:[#allocation3 + $0x608] sm:$0xff]
        %v471 = vld [vmem:[#allocation3 + $0x610] sm:$0xff]
        %v472 = vld [vmem:[#allocation3 + $0x618] sm:$0xff]
        %v473 = vld [vmem:[#allocation3 + $0x620] sm:$0xff]
        %v474 = vld [vmem:[#allocation3 + $0x628] sm:$0xff]
        %v475 = vld [vmem:[#allocation3 + $0x630] sm:$0xff]
        %v476 = vld [vmem:[#allocation3 + $0x638] sm:$0xff]
        %v477 = vld [vmem:[#allocation3 + $0x640] sm:$0xff]
        %v478 = vld [vmem:[#allocation3 + $0x648] sm:$0xff]
        %v479 = vld [vmem:[#allocation3 + $0x650] sm:$0xff]
        %v480 = vld [vmem:[#allocation3 + $0x658] sm:$0xff]
        %v481 = vld [vmem:[#allocation3 + $0x660] sm:$0xff]
        %v482 = vld [vmem:[#allocation3 + $0x668] sm:$0xff]
        %v483 = vld [vmem:[#allocation3 + $0x670] sm:$0xff]
        %v484 = vld [vmem:[#allocation3 + $0x678] sm:$0xff]
        %v485 = vld [vmem:[#allocation3 + $0x680] sm:$0xff]
        %v486 = vld [vmem:[#allocation3 + $0x688] sm:$0xff]
        %v487 = vld [vmem:[#allocation3 + $0x690] sm:$0xff]
        %v488 = vld [vmem:[#allocation3 + $0x698] sm:$0xff]
        %v489 = vld [vmem:[#allocation3 + $0x6a0] sm:$0xff]
        %v490 = vld [vmem:[#allocation3 + $0x6a8] sm:$0xff]
        %v491 = vld [vmem:[#allocation3 + $0x6b0] sm:$0xff]
        %v492 = vld [vmem:[#allocation3 + $0x6b8] sm:$0xff]
        %v493 = vld [vmem:[#allocation3 + $0x6c0] sm:$0xff]
        %v494 = vld [vmem:[#allocation3 + $0x6c8] sm:$0xff]
        %v495 = vld [vmem:[#allocation3 + $0x6d0] sm:$0xff]
        %v496 = vld [vmem:[#allocation3 + $0x6d8] sm:$0xff]
        %v497 = vld [vmem:[#allocation3 + $0x6e0] sm:$0xff]
        %v498 = vld [vmem:[#allocation3 + $0x6e8] sm:$0xff]
        %v499 = vld [vmem:[#allocation3 + $0x6f0] sm:$0xff]
        %v500 = vld [vmem:[#allocation3 + $0x6f8] sm:$0xff]
        %v501 = vld [vmem:[#allocation3 + $0x700] sm:$0xff]
        %v502 = vld [vmem:[#allocation3 + $0x708] sm:$0xff]
        %v503 = vld [vmem:[#allocation3 + $0x710] sm:$0xff]
        %v504 = vld [vmem:[#allocation3 + $0x718] sm:$0xff]
        %v505 = vld [vmem:[#allocation3 + $0x720] sm:$0xff]
        %v506 = vld [vmem:[#allocation3 + $0x728] sm:$0xff]
        %v507 = vld [vmem:[#allocation3 + $0x730] sm:$0xff]
        %v508 = vld [vmem:[#allocation3 + $0x738] sm:$0xff]
        %v509 = vld [vmem:[#allocation3 + $0x740] sm:$0xff]
        %v510 = vld [vmem:[#allocation3 + $0x748] sm:$0xff]
        %v511 = vld [vmem:[#allocation3 + $0x750] sm:$0xff]
        %v512 = vld [vmem:[#allocation3 + $0x758] sm:$0xff]
        %v513 = vld [vmem:[#allocation3 + $0x760] sm:$0xff]
        %v514 = vld [vmem:[#allocation3 + $0x768] sm:$0xff]
        %v515 = vld [vmem:[#allocation3 + $0x770] sm:$0xff]
        %v516 = vld [vmem:[#allocation3 + $0x778] sm:$0xff]
        %v517 = vld [vmem:[#allocation3 + $0x780] sm:$0xff]
        %v518 = vld [vmem:[#allocation3 + $0x788] sm:$0xff]
        %v519 = vld [vmem:[#allocation3 + $0x790] sm:$0xff]
        %v520 = vld [vmem:[#allocation3 + $0x798] sm:$0xff]
        %v521 = vld [vmem:[#allocation3 + $0x7a0] sm:$0xff]
        %v522 = vld [vmem:[#allocation3 + $0x7a8] sm:$0xff]
        %v523 = vld [vmem:[#allocation3 + $0x7b0] sm:$0xff]
        %v524 = vld [vmem:[#allocation3 + $0x7b8] sm:$0xff]
        %v525 = vld [vmem:[#allocation3 + $0x7c0] sm:$0xff]
        %v526 = vld [vmem:[#allocation3 + $0x7c8] sm:$0xff]
        %v527 = vld [vmem:[#allocation3 + $0x7d0] sm:$0xff]
        %v528 = vld [vmem:[#allocation3 + $0x7d8] sm:$0xff]
        %v529 = vld [vmem:[#allocation3 + $0x7e0] sm:$0xff]
        %v530 = vld [vmem:[#allocation3 + $0x7e8] sm:$0xff]
        %v531 = vld [vmem:[#allocation3 + $0x7f0] sm:$0xff]
        %v532 = vld [vmem:[#allocation3 + $0x7f8] sm:$0xff]
        %v533 = vld [vmem:[#allocation3 + $0x800] sm:$0xff]
        %v534 = vld [vmem:[#allocation3 + $0x808] sm:$0xff]
        %v535 = vld [vmem:[#allocation3 + $0x810] sm:$0xff]
        %v536 = vld [vmem:[#allocation3 + $0x818] sm:$0xff]
        %v537 = vld [vmem:[#allocation3 + $0x820] sm:$0xff]
        %v538 = vld [vmem:[#allocation3 + $0x828] sm:$0xff]
        %v539 = vld [vmem:[#allocation3 + $0x830] sm:$0xff]
        %v540 = vld [vmem:[#allocation3 + $0x838] sm:$0xff]
        %v541 = vld [vmem:[#allocation3 + $0x840] sm:$0xff]
        %v542 = vld [vmem:[#allocation3 + $0x848] sm:$0xff]
        %v543 = vld [vmem:[#allocation3 + $0x850] sm:$0xff]
        %v544 = vld [vmem:[#allocation3 + $0x858] sm:$0xff]
        %v545 = vld [vmem:[#allocation3 + $0x860] sm:$0xff]
        %v546 = vld [vmem:[#allocation3 + $0x868] sm:$0xff]
        %v547 = vld [vmem:[#allocation3 + $0x870] sm:$0xff]
        %v548 = vld [vmem:[#allocation3 + $0x878] sm:$0xff]
        %v549 = vld [vmem:[#allocation3 + $0x880] sm:$0xff]
        %v550 = vld [vmem:[#allocation3 + $0x888] sm:$0xff]
        %v551 = vld [vmem:[#allocation3 + $0x890] sm:$0xff]
        %v552 = vld [vmem:[#allocation3 + $0x898] sm:$0xff]
        %v553 = vld [vmem:[#allocation3 + $0x8a0] sm:$0xff]
        %v554 = vld [vmem:[#allocation3 + $0x8a8] sm:$0xff]
        %v555 = vld [vmem:[#allocation3 + $0x8b0] sm:$0xff]
        %v556 = vld [vmem:[#allocation3 + $0x8b8] sm:$0xff]
        %v557 = vld [vmem:[#allocation3 + $0x8c0] sm:$0xff]
        %v558 = vld [vmem:[#allocation3 + $0x8c8] sm:$0xff]
        %v559 = vld [vmem:[#allocation3 + $0x8d0] sm:$0xff]
        %v560 = vld [vmem:[#allocation3 + $0x8d8] sm:$0xff]
        %v561 = vld [vmem:[#allocation3 + $0x8e0] sm:$0xff]
        %v562 = vld [vmem:[#allocation3 + $0x8e8] sm:$0xff]
        %v563 = vld [vmem:[#allocation3 + $0x8f0] sm:$0xff]
        %v564 = vld [vmem:[#allocation3 + $0x8f8] sm:$0xff]
        %v565 = vld [vmem:[#allocation3 + $0x900] sm:$0xff]
        %v566 = vld [vmem:[#allocation3 + $0x908] sm:$0xff]
        %v567 = vld [vmem:[#allocation3 + $0x910] sm:$0xff]
        %v568 = vld [vmem:[#allocation3 + $0x918] sm:$0xff]
        %v569 = vld [vmem:[#allocation3 + $0x920] sm:$0xff]
        %v570 = vld [vmem:[#allocation3 + $0x928] sm:$0xff]
        %v571 = vld [vmem:[#allocation3 + $0x930] sm:$0xff]
        %v572 = vld [vmem:[#allocation3 + $0x938] sm:$0xff]
        %v573 = vld [vmem:[#allocation3 + $0x940] sm:$0xff]
        %v574 = vld [vmem:[#allocation3 + $0x948] sm:$0xff]
        %v575 = vld [vmem:[#allocation3 + $0x950] sm:$0xff]
        %v576 = vld [vmem:[#allocation3 + $0x958] sm:$0xff]
        %v577 = vld [vmem:[#allocation3 + $0x960] sm:$0xff]
        %v578 = vld [vmem:[#allocation3 + $0x968] sm:$0xff]
        %v579 = vld [vmem:[#allocation3 + $0x970] sm:$0xff]
        %v580 = vld [vmem:[#allocation3 + $0x978] sm:$0xff]
        %v581 = vld [vmem:[#allocation3 + $0x980] sm:$0xff]
        %v582 = vld [vmem:[#allocation3 + $0x988] sm:$0xff]
        %v583 = vld [vmem:[#allocation3 + $0x990] sm:$0xff]
        %v584 = vld [vmem:[#allocation3 + $0x998] sm:$0xff]
        %v585 = vld [vmem:[#allocation3 + $0x9a0] sm:$0xff]
        %v586 = vld [vmem:[#allocation3 + $0x9a8] sm:$0xff]
        %v587 = vld [vmem:[#allocation3 + $0x9b0] sm:$0xff]
        %v588 = vld [vmem:[#allocation3 + $0x9b8] sm:$0xff]
        %v589 = vld [vmem:[#allocation3 + $0x9c0] sm:$0xff]
        %v590 = vld [vmem:[#allocation3 + $0x9c8] sm:$0xff]
        %v591 = vld [vmem:[#allocation3 + $0x9d0] sm:$0xff]
        %v592 = vld [vmem:[#allocation3 + $0x9d8] sm:$0xff]
        %v593 = vld [vmem:[#allocation3 + $0x9e0] sm:$0xff]
        %v594 = vld [vmem:[#allocation3 + $0x9e8] sm:$0xff]
        %v595 = vld [vmem:[#allocation3 + $0x9f0] sm:$0xff]
        %v596 = vld [vmem:[#allocation3 + $0x9f8] sm:$0xff]
        %v597 = vld [vmem:[#allocation3 + $0xa00] sm:$0xff]
        %v598 = vld [vmem:[#allocation3 + $0xa08] sm:$0xff]
        %v599 = vld [vmem:[#allocation3 + $0xa10] sm:$0xff]
        %v600 = vld [vmem:[#allocation3 + $0xa18] sm:$0xff]
        %v601 = vld [vmem:[#allocation3 + $0xa20] sm:$0xff]
        %v602 = vld [vmem:[#allocation3 + $0xa28] sm:$0xff]
        %v603 = vld [vmem:[#allocation3 + $0xa30] sm:$0xff]
        %v604 = vld [vmem:[#allocation3 + $0xa38] sm:$0xff]
        %v605 = vld [vmem:[#allocation3 + $0xa40] sm:$0xff]
        %v606 = vld [vmem:[#allocation3 + $0xa48] sm:$0xff]
        %v607 = vld [vmem:[#allocation3 + $0xa50] sm:$0xff]
        %v608 = vld [vmem:[#allocation3 + $0xa58] sm:$0xff]
        %v609 = vld [vmem:[#allocation3 + $0xa60] sm:$0xff]
        %v610 = vld [vmem:[#allocation3 + $0xa68] sm:$0xff]
        %v611 = vld [vmem:[#allocation3 + $0xa70] sm:$0xff]
        %v612 = vld [vmem:[#allocation3 + $0xa78] sm:$0xff]
        %v613 = vld [vmem:[#allocation3 + $0xa80] sm:$0xff]
        %v614 = vld [vmem:[#allocation3 + $0xa88] sm:$0xff]
        %v615 = vld [vmem:[#allocation3 + $0xa90] sm:$0xff]
        %v616 = vld [vmem:[#allocation3 + $0xa98] sm:$0xff]
        %v617 = vld [vmem:[#allocation3 + $0xaa0] sm:$0xff]
        %v618 = vld [vmem:[#allocation3 + $0xaa8] sm:$0xff]
        %v619 = vld [vmem:[#allocation3 + $0xab0] sm:$0xff]
        %v620 = vld [vmem:[#allocation3 + $0xab8] sm:$0xff]
        %v621 = vld [vmem:[#allocation3 + $0xac0] sm:$0xff]
        %v622 = vld [vmem:[#allocation3 + $0xac8] sm:$0xff]
        %v623 = vld [vmem:[#allocation3 + $0xad0] sm:$0xff]
        %v624 = vld [vmem:[#allocation3 + $0xad8] sm:$0xff]
        %v625 = vld [vmem:[#allocation3 + $0xae0] sm:$0xff]
        %v626 = vld [vmem:[#allocation3 + $0xae8] sm:$0xff]
        %v627 = vld [vmem:[#allocation3 + $0xaf0] sm:$0xff]
        %v628 = vld [vmem:[#allocation3 + $0xaf8] sm:$0xff]
        %v629 = vld [vmem:[#allocation3 + $0xb00] sm:$0xff]
        %v630 = vld [vmem:[#allocation3 + $0xb08] sm:$0xff]
        %v631 = vld [vmem:[#allocation3 + $0xb10] sm:$0xff]
        %v632 = vld [vmem:[#allocation3 + $0xb18] sm:$0xff]
        %v633 = vld [vmem:[#allocation3 + $0xb20] sm:$0xff]
        %v634 = vld [vmem:[#allocation3 + $0xb28] sm:$0xff]
        %v635 = vld [vmem:[#allocation3 + $0xb30] sm:$0xff]
        %v636 = vld [vmem:[#allocation3 + $0xb38] sm:$0xff]
        %v637 = vld [vmem:[#allocation3 + $0xb40] sm:$0xff]
        %v638 = vld [vmem:[#allocation3 + $0xb48] sm:$0xff]
        %v639 = vld [vmem:[#allocation3 + $0xb50] sm:$0xff]
        %v640 = vld [vmem:[#allocation3 + $0xb58] sm:$0xff]
        %v641 = vld [vmem:[#allocation3 + $0xb60] sm:$0xff]
        %v642 = vld [vmem:[#allocation3 + $0xb68] sm:$0xff]
        %v643 = vld [vmem:[#allocation3 + $0xb70] sm:$0xff]
        %v644 = vld [vmem:[#allocation3 + $0xb78] sm:$0xff]
        %v645 = vld [vmem:[#allocation3 + $0xb80] sm:$0xff]
        %v646 = vld [vmem:[#allocation3 + $0xb88] sm:$0xff]
        %v647 = vld [vmem:[#allocation3 + $0xb90] sm:$0xff]
        %v648 = vld [vmem:[#allocation3 + $0xb98] sm:$0xff]
        %v649 = vld [vmem:[#allocation3 + $0xba0] sm:$0xff]
        %v650 = vld [vmem:[#allocation3 + $0xba8] sm:$0xff]
        %v651 = vld [vmem:[#allocation3 + $0xbb0] sm:$0xff]
        %v652 = vld [vmem:[#allocation3 + $0xbb8] sm:$0xff]
        %v653 = vld [vmem:[#allocation3 + $0xbc0] sm:$0xff]
        %v654 = vld [vmem:[#allocation3 + $0xbc8] sm:$0xff]
        %v655 = vld [vmem:[#allocation3 + $0xbd0] sm:$0xff]
        %v656 = vld [vmem:[#allocation3 + $0xbd8] sm:$0xff]
        %v657 = vld [vmem:[#allocation3 + $0xbe0] sm:$0xff]
        %v658 = vld [vmem:[#allocation3 + $0xbe8] sm:$0xff]
        %v659 = vld [vmem:[#allocation3 + $0xbf0] sm:$0xff]
        %v660 = vld [vmem:[#allocation3 + $0xbf8] sm:$0xff]
        %v661 = vpack.c.bf16 %v281, %v277
        %v662 = vpack.c.bf16 %v282, %v278
        %v663 = vpack.c.bf16 %v283, %v279
        %v664 = vpack.c.bf16 %v284, %v280
        %v665 = vpack.c.bf16 %v289, %v285
        %v666 = vpack.c.bf16 %v290, %v286
        %v667 = vpack.c.bf16 %v291, %v287
        %v668 = vpack.c.bf16 %v292, %v288
        %v669 = vpack.c.bf16 %v297, %v293
        %v670 = vpack.c.bf16 %v298, %v294
        %v671 = vpack.c.bf16 %v299, %v295
        %v672 = vpack.c.bf16 %v300, %v296
        %v673 = vpack.c.bf16 %v305, %v301
        %v674 = vpack.c.bf16 %v306, %v302
        %v675 = vpack.c.bf16 %v307, %v303
        %v676 = vpack.c.bf16 %v308, %v304
        %v677 = vpack.c.bf16 %v313, %v309
        %v678 = vpack.c.bf16 %v314, %v310
        %v679 = vpack.c.bf16 %v315, %v311
        %v680 = vpack.c.bf16 %v316, %v312
        %v681 = vpack.c.bf16 %v321, %v317
        %v682 = vpack.c.bf16 %v322, %v318
        %v683 = vpack.c.bf16 %v323, %v319
        %v684 = vpack.c.bf16 %v324, %v320
        %v685 = vpack.c.bf16 %v329, %v325
        %v686 = vpack.c.bf16 %v330, %v326
        %v687 = vpack.c.bf16 %v331, %v327
        %v688 = vpack.c.bf16 %v332, %v328
        %v689 = vpack.c.bf16 %v337, %v333
        %v690 = vpack.c.bf16 %v338, %v334
        %v691 = vpack.c.bf16 %v339, %v335
        %v692 = vpack.c.bf16 %v340, %v336
        %v693 = vpack.c.bf16 %v345, %v341
        %v694 = vpack.c.bf16 %v346, %v342
        %v695 = vpack.c.bf16 %v347, %v343
        %v696 = vpack.c.bf16 %v348, %v344
        %v697 = vpack.c.bf16 %v353, %v349
        %v698 = vpack.c.bf16 %v354, %v350
        %v699 = vpack.c.bf16 %v355, %v351
        %v700 = vpack.c.bf16 %v356, %v352
        %v701 = vpack.c.bf16 %v361, %v357
        %v702 = vpack.c.bf16 %v362, %v358
        %v703 = vpack.c.bf16 %v363, %v359
        %v704 = vpack.c.bf16 %v364, %v360
        %v705 = vpack.c.bf16 %v369, %v365
        %v706 = vpack.c.bf16 %v370, %v366
        %v707 = vpack.c.bf16 %v371, %v367
        %v708 = vpack.c.bf16 %v372, %v368
        %v709 = vpack.c.bf16 %v377, %v373
        %v710 = vpack.c.bf16 %v378, %v374
        %v711 = vpack.c.bf16 %v379, %v375
        %v712 = vpack.c.bf16 %v380, %v376
        %v713 = vpack.c.bf16 %v385, %v381
        %v714 = vpack.c.bf16 %v386, %v382
        %v715 = vpack.c.bf16 %v387, %v383
        %v716 = vpack.c.bf16 %v388, %v384
        %v717 = vpack.c.bf16 %v393, %v389
        %v718 = vpack.c.bf16 %v394, %v390
        %v719 = vpack.c.bf16 %v395, %v391
        %v720 = vpack.c.bf16 %v396, %v392
        %v721 = vpack.c.bf16 %v401, %v397
        %v722 = vpack.c.bf16 %v402, %v398
        %v723 = vpack.c.bf16 %v403, %v399
        %v724 = vpack.c.bf16 %v404, %v400
        %v725 = vpack.c.bf16 %v409, %v405
        %v726 = vpack.c.bf16 %v410, %v406
        %v727 = vpack.c.bf16 %v411, %v407
        %v728 = vpack.c.bf16 %v412, %v408
        %v729 = vpack.c.bf16 %v417, %v413
        %v730 = vpack.c.bf16 %v418, %v414
        %v731 = vpack.c.bf16 %v419, %v415
        %v732 = vpack.c.bf16 %v420, %v416
        %v733 = vpack.c.bf16 %v425, %v421
        %v734 = vpack.c.bf16 %v426, %v422
        %v735 = vpack.c.bf16 %v427, %v423
        %v736 = vpack.c.bf16 %v428, %v424
        %v737 = vpack.c.bf16 %v433, %v429
        %v738 = vpack.c.bf16 %v434, %v430
        %v739 = vpack.c.bf16 %v435, %v431
        %v740 = vpack.c.bf16 %v436, %v432
        %v741 = vpack.c.bf16 %v441, %v437
        %v742 = vpack.c.bf16 %v442, %v438
        %v743 = vpack.c.bf16 %v443, %v439
        %v744 = vpack.c.bf16 %v444, %v440
        %v745 = vpack.c.bf16 %v449, %v445
        %v746 = vpack.c.bf16 %v450, %v446
        %v747 = vpack.c.bf16 %v451, %v447
        %v748 = vpack.c.bf16 %v452, %v448
        %v749 = vpack.c.bf16 %v457, %v453
        %v750 = vpack.c.bf16 %v458, %v454
        %v751 = vpack.c.bf16 %v459, %v455
        %v752 = vpack.c.bf16 %v460, %v456
        %v753 = vpack.c.bf16 %v465, %v461
        %v754 = vpack.c.bf16 %v466, %v462
        %v755 = vpack.c.bf16 %v467, %v463
        %v756 = vpack.c.bf16 %v468, %v464
        %v757 = vpack.c.bf16 %v473, %v469
        %v758 = vpack.c.bf16 %v474, %v470
        %v759 = vpack.c.bf16 %v475, %v471
        %v760 = vpack.c.bf16 %v476, %v472
        %v761 = vpack.c.bf16 %v481, %v477
        %v762 = vpack.c.bf16 %v482, %v478
        %v763 = vpack.c.bf16 %v483, %v479
        %v764 = vpack.c.bf16 %v484, %v480
        %v765 = vpack.c.bf16 %v489, %v485
        %v766 = vpack.c.bf16 %v490, %v486
        %v767 = vpack.c.bf16 %v491, %v487
        %v768 = vpack.c.bf16 %v492, %v488
        %v769 = vpack.c.bf16 %v497, %v493
        %v770 = vpack.c.bf16 %v498, %v494
        %v771 = vpack.c.bf16 %v499, %v495
        %v772 = vpack.c.bf16 %v500, %v496
        %v773 = vpack.c.bf16 %v505, %v501
        %v774 = vpack.c.bf16 %v506, %v502
        %v775 = vpack.c.bf16 %v507, %v503
        %v776 = vpack.c.bf16 %v508, %v504
        %v777 = vpack.c.bf16 %v513, %v509
        %v778 = vpack.c.bf16 %v514, %v510
        %v779 = vpack.c.bf16 %v515, %v511
        %v780 = vpack.c.bf16 %v516, %v512
        %v781 = vpack.c.bf16 %v521, %v517
        %v782 = vpack.c.bf16 %v522, %v518
        %v783 = vpack.c.bf16 %v523, %v519
        %v784 = vpack.c.bf16 %v524, %v520
        %v785 = vpack.c.bf16 %v529, %v525
        %v786 = vpack.c.bf16 %v530, %v526
        %v787 = vpack.c.bf16 %v531, %v527
        %v788 = vpack.c.bf16 %v532, %v528
        %v789 = vpack.c.bf16 %v537, %v533
        %v790 = vpack.c.bf16 %v538, %v534
        %v791 = vpack.c.bf16 %v539, %v535
        %v792 = vpack.c.bf16 %v540, %v536
        %v793 = vpack.c.bf16 %v545, %v541
        %v794 = vpack.c.bf16 %v546, %v542
        %v795 = vpack.c.bf16 %v547, %v543
        %v796 = vpack.c.bf16 %v548, %v544
        %v797 = vpack.c.bf16 %v553, %v549
        %v798 = vpack.c.bf16 %v554, %v550
        %v799 = vpack.c.bf16 %v555, %v551
        %v800 = vpack.c.bf16 %v556, %v552
        %v801 = vpack.c.bf16 %v561, %v557
        %v802 = vpack.c.bf16 %v562, %v558
        %v803 = vpack.c.bf16 %v563, %v559
        %v804 = vpack.c.bf16 %v564, %v560
        %v805 = vpack.c.bf16 %v569, %v565
        %v806 = vpack.c.bf16 %v570, %v566
        %v807 = vpack.c.bf16 %v571, %v567
        %v808 = vpack.c.bf16 %v572, %v568
        %v809 = vpack.c.bf16 %v577, %v573
        %v810 = vpack.c.bf16 %v578, %v574
        %v811 = vpack.c.bf16 %v579, %v575
        %v812 = vpack.c.bf16 %v580, %v576
        %v813 = vpack.c.bf16 %v585, %v581
        %v814 = vpack.c.bf16 %v586, %v582
        %v815 = vpack.c.bf16 %v587, %v583
        %v816 = vpack.c.bf16 %v588, %v584
        %v817 = vpack.c.bf16 %v593, %v589
        %v818 = vpack.c.bf16 %v594, %v590
        %v819 = vpack.c.bf16 %v595, %v591
        %v820 = vpack.c.bf16 %v596, %v592
        %v821 = vpack.c.bf16 %v601, %v597
        %v822 = vpack.c.bf16 %v602, %v598
        %v823 = vpack.c.bf16 %v603, %v599
        %v824 = vpack.c.bf16 %v604, %v600
        %v825 = vpack.c.bf16 %v609, %v605
        %v826 = vpack.c.bf16 %v610, %v606
        %v827 = vpack.c.bf16 %v611, %v607
        %v828 = vpack.c.bf16 %v612, %v608
        %v829 = vpack.c.bf16 %v617, %v613
        %v830 = vpack.c.bf16 %v618, %v614
        %v831 = vpack.c.bf16 %v619, %v615
        %v832 = vpack.c.bf16 %v620, %v616
        %v833 = vpack.c.bf16 %v625, %v621
        %v834 = vpack.c.bf16 %v626, %v622
        %v835 = vpack.c.bf16 %v627, %v623
        %v836 = vpack.c.bf16 %v628, %v624
        %v837 = vpack.c.bf16 %v633, %v629
        %v838 = vpack.c.bf16 %v634, %v630
        %v839 = vpack.c.bf16 %v635, %v631
        %v840 = vpack.c.bf16 %v636, %v632
        %v841 = vpack.c.bf16 %v641, %v637
        %v842 = vpack.c.bf16 %v642, %v638
        %v843 = vpack.c.bf16 %v643, %v639
        %v844 = vpack.c.bf16 %v644, %v640
        %v845 = vpack.c.bf16 %v649, %v645
        %v846 = vpack.c.bf16 %v650, %v646
        %v847 = vpack.c.bf16 %v651, %v647
        %v848 = vpack.c.bf16 %v652, %v648
        %v849 = vpack.c.bf16 %v657, %v653
        %v850 = vpack.c.bf16 %v658, %v654
        %v851 = vpack.c.bf16 %v659, %v655
        %v852 = vpack.c.bf16 %v660, %v656
        %v853 = vld [vmem:[#allocation5] sm:$0xf]
        %v855 = vlaneseq
        %v856 = vshrl.u32 %v855, 7
        %v857 = vsub.s32 0, %v856
        %v858 = vrot.slane %v853, %v857
        %v859 = vlaneseq
        %v860 = vshrl.u32 %v859, 7
        %v861 = vsub.s32 1, %v860
        %v862 = vrot.slane %v853, %v861
        %v863 = vlaneseq
        %v864 = vshrl.u32 %v863, 7
        %v865 = vsub.s32 2, %v864
        %v866 = vrot.slane %v853, %v865
        %v867 = vlaneseq
        %v868 = vshrl.u32 %v867, 7
        %v869 = vsub.s32 3, %v868
        %v870 = vrot.slane %v853, %v869
        %875 = vmatprep.subr.bf16.mxu0 %v662
        %876 = vmatpush1.bf16.msra.mxu0 %v661
        %877 = vmatprep.subr.bf16.mxu0 %v666
        %878 = vmatpush1.bf16.msra.mxu0 %v665
        %879 = vmatprep.subr.bf16.mxu0 %v670
        %880 = vmatpush1.bf16.msra.mxu0 %v669
        %881 = vmatprep.subr.bf16.mxu0 %v674
        %882 = vmatpush1.bf16.msra.mxu0 %v673
        %883 = vmatprep.subr.bf16.mxu0 %v678
        %884 = vmatpush1.bf16.msra.mxu0 %v677
        %885 = vmatprep.subr.bf16.mxu0 %v682
        %886 = vmatpush1.bf16.msra.mxu0 %v681
        %887 = vmatprep.subr.bf16.mxu0 %v686
        %888 = vmatpush1.bf16.msra.mxu0 %v685
        %889 = vmatprep.subr.bf16.mxu0 %v690
        %890 = vmatpush1.bf16.msra.mxu0 %v689
        %891 = vmatprep.subr.bf16.mxu0 %v694
        %892 = vmatpush1.bf16.msra.mxu0 %v693
        %893 = vmatprep.subr.bf16.mxu0 %v698
        %894 = vmatpush1.bf16.msra.mxu0 %v697
        %895 = vmatprep.subr.bf16.mxu0 %v702
        %896 = vmatpush1.bf16.msra.mxu0 %v701
        %897 = vmatprep.subr.bf16.mxu0 %v706
        %898 = vmatpush1.bf16.msra.mxu0 %v705
        %899 = vmatprep.subr.bf16.mxu0 %v710
        %900 = vmatpush1.bf16.msra.mxu0 %v709
        %901 = vmatprep.subr.bf16.mxu0 %v714
        %902 = vmatpush1.bf16.msra.mxu0 %v713
        %903 = vmatprep.subr.bf16.mxu0 %v718
        %904 = vmatpush1.bf16.msra.mxu0 %v717
        %905 = vmatprep.subr.bf16.mxu0 %v722
        %906 = vmatpush1.bf16.msra.mxu0 %v721
        %907 = vmatprep.mubr.bf16.mxu0 %v272
        %908 = vmatmul.mubr.bf16.gmra.mrb[0].mxu0 %v271
        %v909 = vpop.f32.mrb[0].mxu0
        %v910 = vadd.f32 %v858, %v909
        %v911 = vpop.f32.mrb[0].mxu0
        %v912 = vadd.f32 %v862, %v911
        %v913 = vpop.f32.mrb[0].mxu0
        %v914 = vpop.f32.mrb[0].mxu0
        %915 = vdwg.mxu0
        %916 = vmatprep.subr.bf16.mxu0 %v726
        %917 = vmatpush1.bf16.msra.mxu0 %v725
        %918 = vmatprep.subr.bf16.mxu0 %v730
        %919 = vmatpush1.bf16.msra.mxu0 %v729
        %920 = vmatprep.subr.bf16.mxu0 %v734
        %921 = vmatpush1.bf16.msra.mxu0 %v733
        %922 = vmatprep.subr.bf16.mxu0 %v738
        %923 = vmatpush1.bf16.msra.mxu0 %v737
        %924 = vmatprep.subr.bf16.mxu0 %v742
        %925 = vmatpush1.bf16.msra.mxu0 %v741
        %926 = vmatprep.subr.bf16.mxu0 %v746
        %927 = vmatpush1.bf16.msra.mxu0 %v745
        %928 = vmatprep.subr.bf16.mxu0 %v750
        %929 = vmatpush1.bf16.msra.mxu0 %v749
        %930 = vmatprep.subr.bf16.mxu0 %v754
        %931 = vmatpush1.bf16.msra.mxu0 %v753
        %932 = vmatprep.subr.bf16.mxu0 %v758
        %933 = vmatpush1.bf16.msra.mxu0 %v757
        %934 = vmatprep.subr.bf16.mxu0 %v762
        %935 = vmatpush1.bf16.msra.mxu0 %v761
        %936 = vmatprep.subr.bf16.mxu0 %v766
        %937 = vmatpush1.bf16.msra.mxu0 %v765
        %938 = vmatprep.subr.bf16.mxu0 %v770
        %939 = vmatpush1.bf16.msra.mxu0 %v769
        %940 = vmatprep.subr.bf16.mxu0 %v774
        %941 = vmatpush1.bf16.msra.mxu0 %v773
        %942 = vmatprep.subr.bf16.mxu0 %v778
        %943 = vmatpush1.bf16.msra.mxu0 %v777
        %944 = vmatprep.subr.bf16.mxu0 %v782
        %945 = vmatpush1.bf16.msra.mxu0 %v781
        %946 = vmatprep.subr.bf16.mxu0 %v786
        %947 = vmatpush1.bf16.msra.mxu0 %v785
        %948 = vmatprep.mubr.bf16.mxu0 %v274
        %949 = vmatmul.mubr.bf16.gmra.mrb[0].mxu0 %v273
        %v950 = vpop.f32.mrb[0].mxu0
        %v951 = vadd.f32 %v910, %v950
        %v952 = vpop.f32.mrb[0].mxu0
        %v953 = vadd.f32 %v912, %v952
        %v954 = vpop.f32.mrb[0].mxu0
        %v955 = vpop.f32.mrb[0].mxu0
        %956 = vdwg.mxu0
        %957 = vmatprep.subr.bf16.mxu0 %v790
        %958 = vmatpush1.bf16.msra.mxu0 %v789
        %959 = vmatprep.subr.bf16.mxu0 %v794
        %960 = vmatpush1.bf16.msra.mxu0 %v793
        %961 = vmatprep.subr.bf16.mxu0 %v798
        %962 = vmatpush1.bf16.msra.mxu0 %v797
        %963 = vmatprep.subr.bf16.mxu0 %v802
        %964 = vmatpush1.bf16.msra.mxu0 %v801
        %965 = vmatprep.subr.bf16.mxu0 %v806
        %966 = vmatpush1.bf16.msra.mxu0 %v805
        %967 = vmatprep.subr.bf16.mxu0 %v810
        %968 = vmatpush1.bf16.msra.mxu0 %v809
        %969 = vmatprep.subr.bf16.mxu0 %v814
        %970 = vmatpush1.bf16.msra.mxu0 %v813
        %971 = vmatprep.subr.bf16.mxu0 %v818
        %972 = vmatpush1.bf16.msra.mxu0 %v817
        %973 = vmatprep.subr.bf16.mxu0 %v822
        %974 = vmatpush1.bf16.msra.mxu0 %v821
        %975 = vmatprep.subr.bf16.mxu0 %v826
        %976 = vmatpush1.bf16.msra.mxu0 %v825
        %977 = vmatprep.subr.bf16.mxu0 %v830
        %978 = vmatpush1.bf16.msra.mxu0 %v829
        %979 = vmatprep.subr.bf16.mxu0 %v834
        %980 = vmatpush1.bf16.msra.mxu0 %v833
        %981 = vmatprep.subr.bf16.mxu0 %v838
        %982 = vmatpush1.bf16.msra.mxu0 %v837
        %983 = vmatprep.subr.bf16.mxu0 %v842
        %984 = vmatpush1.bf16.msra.mxu0 %v841
        %985 = vmatprep.subr.bf16.mxu0 %v846
        %986 = vmatpush1.bf16.msra.mxu0 %v845
        %987 = vmatprep.subr.bf16.mxu0 %v850
        %988 = vmatpush1.bf16.msra.mxu0 %v849
        %989 = vmatprep.mubr.bf16.mxu0 %v276
        %990 = vmatmul.mubr.bf16.gmra.mrb[0].mxu0 %v275
        %v991 = vpop.f32.mrb[0].mxu0
        %v992 = vadd.f32 %v951, %v991
        %v993 = vpop.f32.mrb[0].mxu0
        %v994 = vadd.f32 %v953, %v993
        %v995 = vpop.f32.mrb[0].mxu0
        %v996 = vpop.f32.mrb[0].mxu0
        %997 = vdwg.mxu0
        %998 = vmatprep.subr.bf16.mxu0 %v664
        %999 = vmatpush1.bf16.msra.mxu0 %v663
        %1000 = vmatprep.subr.bf16.mxu0 %v668
        %1001 = vmatpush1.bf16.msra.mxu0 %v667
        %1002 = vmatprep.subr.bf16.mxu0 %v672
        %1003 = vmatpush1.bf16.msra.mxu0 %v671
        %1004 = vmatprep.subr.bf16.mxu0 %v676
        %1005 = vmatpush1.bf16.msra.mxu0 %v675
        %1006 = vmatprep.subr.bf16.mxu0 %v680
        %1007 = vmatpush1.bf16.msra.mxu0 %v679
        %1008 = vmatprep.subr.bf16.mxu0 %v684
        %1009 = vmatpush1.bf16.msra.mxu0 %v683
        %1010 = vmatprep.subr.bf16.mxu0 %v688
        %1011 = vmatpush1.bf16.msra.mxu0 %v687
        %1012 = vmatprep.subr.bf16.mxu0 %v692
        %1013 = vmatpush1.bf16.msra.mxu0 %v691
        %1014 = vmatprep.subr.bf16.mxu0 %v696
        %1015 = vmatpush1.bf16.msra.mxu0 %v695
        %1016 = vmatprep.subr.bf16.mxu0 %v700
        %1017 = vmatpush1.bf16.msra.mxu0 %v699
        %1018 = vmatprep.subr.bf16.mxu0 %v704
        %1019 = vmatpush1.bf16.msra.mxu0 %v703
        %1020 = vmatprep.subr.bf16.mxu0 %v708
        %1021 = vmatpush1.bf16.msra.mxu0 %v707
        %1022 = vmatprep.subr.bf16.mxu0 %v712
        %1023 = vmatpush1.bf16.msra.mxu0 %v711
        %1024 = vmatprep.subr.bf16.mxu0 %v716
        %1025 = vmatpush1.bf16.msra.mxu0 %v715
        %1026 = vmatprep.subr.bf16.mxu0 %v720
        %1027 = vmatpush1.bf16.msra.mxu0 %v719
        %1028 = vmatprep.subr.bf16.mxu0 %v724
        %1029 = vmatpush1.bf16.msra.mxu0 %v723
        %1030 = vmatprep.mubr.bf16.mxu0 %v272
        %1031 = vmatmul.mubr.bf16.gmra.mrb[0].mxu0 %v271
        %v1032 = vpop.f32.mrb[0].mxu0
        %v1033 = vadd.f32 %v866, %v1032
        %v1034 = vpop.f32.mrb[0].mxu0
        %v1035 = vadd.f32 %v870, %v1034
        %v1036 = vpop.f32.mrb[0].mxu0
        %v1037 = vpop.f32.mrb[0].mxu0
        %1038 = vdwg.mxu0
        %1039 = vmatprep.subr.bf16.mxu0 %v728
        %1040 = vmatpush1.bf16.msra.mxu0 %v727
        %1041 = vmatprep.subr.bf16.mxu0 %v732
        %1042 = vmatpush1.bf16.msra.mxu0 %v731
        %1043 = vmatprep.subr.bf16.mxu0 %v736
        %1044 = vmatpush1.bf16.msra.mxu0 %v735
        %1045 = vmatprep.subr.bf16.mxu0 %v740
        %1046 = vmatpush1.bf16.msra.mxu0 %v739
        %1047 = vmatprep.subr.bf16.mxu0 %v744
        %1048 = vmatpush1.bf16.msra.mxu0 %v743
        %1049 = vmatprep.subr.bf16.mxu0 %v748
        %1050 = vmatpush1.bf16.msra.mxu0 %v747
        %1051 = vmatprep.subr.bf16.mxu0 %v752
        %1052 = vmatpush1.bf16.msra.mxu0 %v751
        %1053 = vmatprep.subr.bf16.mxu0 %v756
        %1054 = vmatpush1.bf16.msra.mxu0 %v755
        %1055 = vmatprep.subr.bf16.mxu0 %v760
        %1056 = vmatpush1.bf16.msra.mxu0 %v759
        %1057 = vmatprep.subr.bf16.mxu0 %v764
        %1058 = vmatpush1.bf16.msra.mxu0 %v763
        %1059 = vmatprep.subr.bf16.mxu0 %v768
        %1060 = vmatpush1.bf16.msra.mxu0 %v767
        %1061 = vmatprep.subr.bf16.mxu0 %v772
        %1062 = vmatpush1.bf16.msra.mxu0 %v771
        %1063 = vmatprep.subr.bf16.mxu0 %v776
        %1064 = vmatpush1.bf16.msra.mxu0 %v775
        %1065 = vmatprep.subr.bf16.mxu0 %v780
        %1066 = vmatpush1.bf16.msra.mxu0 %v779
        %1067 = vmatprep.subr.bf16.mxu0 %v784
        %1068 = vmatpush1.bf16.msra.mxu0 %v783
        %1069 = vmatprep.subr.bf16.mxu0 %v788
        %1070 = vmatpush1.bf16.msra.mxu0 %v787
        %1071 = vmatprep.mubr.bf16.mxu0 %v274
        %1072 = vmatmul.mubr.bf16.gmra.mrb[0].mxu0 %v273
        %v1073 = vpop.f32.mrb[0].mxu0
        %v1074 = vadd.f32 %v1033, %v1073
        %v1075 = vpop.f32.mrb[0].mxu0
        %v1076 = vadd.f32 %v1035, %v1075
        %v1077 = vpop.f32.mrb[0].mxu0
        %v1078 = vpop.f32.mrb[0].mxu0
        %1079 = vdwg.mxu0
        %1080 = vmatprep.subr.bf16.mxu0 %v792
        %1081 = vmatpush1.bf16.msra.mxu0 %v791
        %1082 = vmatprep.subr.bf16.mxu0 %v796
        %1083 = vmatpush1.bf16.msra.mxu0 %v795
        %1084 = vmatprep.subr.bf16.mxu0 %v800
        %1085 = vmatpush1.bf16.msra.mxu0 %v799
        %1086 = vmatprep.subr.bf16.mxu0 %v804
        %1087 = vmatpush1.bf16.msra.mxu0 %v803
        %1088 = vmatprep.subr.bf16.mxu0 %v808
        %1089 = vmatpush1.bf16.msra.mxu0 %v807
        %1090 = vmatprep.subr.bf16.mxu0 %v812
        %1091 = vmatpush1.bf16.msra.mxu0 %v811
        %1092 = vmatprep.subr.bf16.mxu0 %v816
        %1093 = vmatpush1.bf16.msra.mxu0 %v815
        %1094 = vmatprep.subr.bf16.mxu0 %v820
        %1095 = vmatpush1.bf16.msra.mxu0 %v819
        %1096 = vmatprep.subr.bf16.mxu0 %v824
        %1097 = vmatpush1.bf16.msra.mxu0 %v823
        %1098 = vmatprep.subr.bf16.mxu0 %v828
        %1099 = vmatpush1.bf16.msra.mxu0 %v827
        %1100 = vmatprep.subr.bf16.mxu0 %v832
        %1101 = vmatpush1.bf16.msra.mxu0 %v831
        %1102 = vmatprep.subr.bf16.mxu0 %v836
        %1103 = vmatpush1.bf16.msra.mxu0 %v835
        %1104 = vmatprep.subr.bf16.mxu0 %v840
        %1105 = vmatpush1.bf16.msra.mxu0 %v839
        %1106 = vmatprep.subr.bf16.mxu0 %v844
        %1107 = vmatpush1.bf16.msra.mxu0 %v843
        %1108 = vmatprep.subr.bf16.mxu0 %v848
        %1109 = vmatpush1.bf16.msra.mxu0 %v847
        %1110 = vmatprep.subr.bf16.mxu0 %v852
        %1111 = vmatpush1.bf16.msra.mxu0 %v851
        %1112 = vmatprep.mubr.bf16.mxu0 %v276
        %1113 = vmatmul.mubr.bf16.gmra.mrb[0].mxu0 %v275
        %v1114 = vpop.f32.mrb[0].mxu0
        %v1115 = vadd.f32 %v1074, %v1114
        %v1116 = vpop.f32.mrb[0].mxu0
        %v1117 = vadd.f32 %v1076, %v1116
        %v1118 = vpop.f32.mrb[0].mxu0
        %v1119 = vpop.f32.mrb[0].mxu0
        %1120 = vdwg.mxu0
        %v1121 = vmax.f32 %v992, 0.0
        %v1122 = vmax.f32 %v994, 0.0
        %v1123 = vmax.f32 %v1115, 0.0
        %v1124 = vmax.f32 %v1117, 0.0
        %v1125 = vld [vmem:[#allocation7] sm:$0xf]
        %v1127 = vlaneseq
        %v1128 = vshrl.u32 %v1127, 7
        %v1129 = vsub.s32 0, %v1128
        %v1130 = vrot.slane %v1125, %v1129
        %v1131 = vlaneseq
        %v1132 = vshrl.u32 %v1131, 7
        %v1133 = vsub.s32 1, %v1132
        %v1134 = vrot.slane %v1125, %v1133
        %v1135 = vlaneseq
        %v1136 = vshrl.u32 %v1135, 7
        %v1137 = vsub.s32 2, %v1136
        %v1138 = vrot.slane %v1125, %v1137
        %v1139 = vlaneseq
        %v1140 = vshrl.u32 %v1139, 7
        %v1141 = vsub.s32 3, %v1140
        %v1142 = vrot.slane %v1125, %v1141
        %v1147 = vmul.f32 %v1121, %v1130
        %v1148 = vmul.f32 %v1122, %v1134
        %v1149 = vmul.f32 %v1123, %v1138
        %v1150 = vmul.f32 %v1124, %v1142
        %v1151 = vadd.f32 %v1147, %v1148
        %v1152 = vadd.f32 %v1151, %v1149
        %v1153 = vadd.f32 %v1152, %v1150
        %1154 = vadd.xlane.f32.xlu0 %v1153
        %v1155 = vpop.xlane.xlu0 %1154
        %v1156 = vld [vmem:[#allocation2] sm:$0x1]
        %v1158 = vlaneseq
        %v1159 = vshrl.u32 %v1158, 7
        %v1160 = vsub.s32 0, %v1159
        %v1161 = vrot.slane %v1156, %v1160
        %v1163 = vadd.f32 %v1155, %v1161
        %v1164 = vxor.u32 %v1163, 2147483648
        %v1165 = vmul.f32 %v1164, 1.442695
        %v1166 = vpow.pop %v1165
        %v1167 = vadd.f32 %v1166, 1.0
        %v1168 = vrcp.pop %v1167
        %v1169 = vmul.f32 1.0, %v1168
        %vm1170 = vcmask 7168
        %1171 = vst.msk [vmem:[%s264] sm:$0xff] %vm1170, %v1169
        %p1172 = scmp.lt.s32.totalorder %s20, 2
        %s1173 = scalar_select %p1172, %s20, 2
        %s1174 = smul.addr %s1173, 8
        %s1175 = scalar_lea.vmem %s5, %s1174
        // Predicated region
        $region53: #{simple_classifier_forward.1} parent=39 // pred_check
          %p1176 = pneg %p148
        $region54: #{simple_classifier_forward.1} parent=39 // pred_check_branch
          %1178 = sbr.rel (%p1176) target = $region56
        $region55: #{simple_classifier_forward.1} parent=39 // pred_region
          _
        $region56: #{simple_classifier_forward.1} parent=39 // pred_fallthru
          _
      $region40: #{simple_classifier_forward.1} parent=5 // pred_fallthru
        _
      %p1179 = scmp.le.s32.totalorder 2, %s15
      // Predicated region
      $region57: #{simple_classifier_forward.1} parent=5 // pred_check
        %p1180 = pneg %p1179
      $region58: #{simple_classifier_forward.1} parent=5 // pred_check_branch
        %1182 = sbr.rel (%p1180) target = $region60
      $region59: #{simple_classifier_forward.1} parent=5 // pred_region
        %s1183 = ssub.s32 %s15, 2
        // Predicated region
        $region61: #{simple_classifier_forward.1} parent=59 // pred_check
          %p1184 = pneg %p154
        $region62: #{simple_classifier_forward.1} parent=59 // pred_check_branch
          %1186 = sbr.rel (%p1184) target = $region64
        $region63: #{simple_classifier_forward.1} parent=59 // pred_region
          %p1187 = scmp.lt.s32.totalorder %s21, 2
          %s1188 = scalar_select %p1187, %s21, 2
          %s1189 = smul.addr %s1188, 8
          %s1190 = scalar_lea.vmem %s5, %s1189
        $region64: #{simple_classifier_forward.1} parent=59 // pred_fallthru
          _
      $region60: #{simple_classifier_forward.1} parent=5 // pred_fallthru
        _
    $region6: #{simple_classifier_forward.1} parent=1 // loop_footer
      %s19 = sadd.s32 1, %s15
    $region7: #{simple_classifier_forward.1} parent=1 // loop_footer_branch
      %14 = sbr.rel target = $region3
    $region8: #{simple_classifier_forward.1} parent=1 // loop_exit
      _
    %1191 = vsyncpa [#allocation4], 1
    %s1192 = scalar_lea.sflag [#allocation4], 1
    %1193 = vsyncpa %s1192, 1
    %1194 = vsyncpa [#allocation6], 1

</llo_original>
